<compile_context>
chip_gen: v6e
topology: v6e:2x2x1
jax: 0.10.0
libtpu: 0.0.40
codegen_flags: <defaults>
</compile_context>

<pallas_src>
import jax
import jax.numpy as jnp
from jax.experimental import pallas as pl
from jax.experimental.pallas import tpu as pltpu

_LANE_ALIGN = 256  # keep tiles multiples of 256 lanes (full MXU result block on v6e/v7x)


def _round_up(x, m):
    return ((x + m - 1) // m) * m


def _vmem_capacity_bytes():
    try:
        return int(pltpu.get_tpu_info().vmem_capacity_bytes)
    except Exception:
        return 64 << 20  # conservative default (v7x-sized VMEM per TensorCore)


def _choose_tiling(n, max_tile):
    """Pick (tile, n_pad, grid_steps, vmem_limit_bytes) for a batch of n columns."""
    vmem = _vmem_capacity_bytes()
    if vmem >= (100 << 20):
        # v5e / v6e: 128 MiB VMEM per TensorCore, single TC per chip.
        cap, vmem_limit, two_cores = 256 * 1024, 64 << 20, False
    else:
        # v7x: 64 MiB VMEM per TensorCore, 2 TCs per chip -> smaller cap, even grid.
        cap, vmem_limit, two_cores = 128 * 1024, 40 << 20, True
    if max_tile is not None:
        cap = min(cap, _round_up(int(max_tile), _LANE_ALIGN))

    n_al = _round_up(max(int(n), 1), _LANE_ALIGN)
    steps = pl.cdiv(n_al, cap)
    if two_cores and n_al >= 2 * _LANE_ALIGN:
        if steps < 2:
            steps = 2            # make sure both TensorCores get work
        elif steps % 2:
            steps += 1           # keep the parallel axis evenly splittable
    tile = _round_up(pl.cdiv(n_al, steps), _LANE_ALIGN)
    n_pad = tile * steps
    return tile, n_pad, steps, vmem_limit


def irisnet_kernel(x_ref, w1_ref, b1_ref, w2_ref, b2_ref, out_ref):
    # x: (4, T) bf16 | w1: (10, 4) bf16 | b1: (10, 1) f32
    # w2: (3, 10) bf16 | b2: (3, 1) f32 | out: (3, T) out_dtype
    h = jnp.dot(w1_ref[...], x_ref[...], preferred_element_type=jnp.float32)
    h = jnp.maximum(h + b1_ref[...], 0.0)                      # fc1 + ReLU, f32 accum
    y = jnp.dot(w2_ref[...], h.astype(jnp.bfloat16),
                preferred_element_type=jnp.float32) + b2_ref[...]
    out_ref[...] = y.astype(out_ref.dtype)


def irisnet_forward_cn(x_cn, w1, b1, w2, b2, *, out_dtype=jnp.bfloat16, max_tile=None):
    """Feature-major forward pass: x_cn (4, N) -> logits (3, N) in out_dtype.

    This is the layout-native path: no transpose passes, bf16 streams both ways.
    torch-layout params: w1 (10, 4), b1 (10,), w2 (3, 10), b2 (3,).
    """
    feat, n = x_cn.shape
    assert feat == 4, f"expected 4 input features, got {feat}"
    tile, n_pad, steps, vmem_limit = _choose_tiling(n, max_tile)

    x_cn = x_cn.astype(jnp.bfloat16)
    if n_pad != n:
        x_cn = jnp.pad(x_cn, ((0, 0), (0, n_pad - n)))   # minimal lane-alignment pad only

    out_bytes = jnp.dtype(out_dtype).itemsize
    flops = 2 * n_pad * (4 * 10 + 10 * 3)
    bytes_accessed = n_pad * 4 * 2 + n_pad * 3 * out_bytes + (10 * 4 + 10 + 3 * 10 + 3) * 4

    out_cn = pl.pallas_call(
        irisnet_kernel,
        out_shape=jax.ShapeDtypeStruct((3, n_pad), out_dtype),
        grid=(steps,),
        in_specs=[
            pl.BlockSpec((4, tile), lambda i: (0, i)),     # x tile: streamed, double-buffered
            pl.BlockSpec((10, 4), lambda i: (0, 0)),       # weights/biases resident in VMEM
            pl.BlockSpec((10, 1), lambda i: (0, 0)),
            pl.BlockSpec((3, 10), lambda i: (0, 0)),
            pl.BlockSpec((3, 1), lambda i: (0, 0)),
        ],
        out_specs=pl.BlockSpec((3, tile), lambda i: (0, i)),
        compiler_params=pltpu.CompilerParams(
            dimension_semantics=("parallel",),
            vmem_limit_bytes=vmem_limit),
        cost_estimate=pl.CostEstimate(
            flops=flops, transcendentals=0, bytes_accessed=bytes_accessed),
    )(x_cn,
      w1.astype(jnp.bfloat16),
      b1.reshape(10, 1).astype(jnp.float32),
      w2.astype(jnp.bfloat16),
      b2.reshape(3, 1).astype(jnp.float32))

    return out_cn if n_pad == n else out_cn[:, :n]


def irisnet_forward(x, w1, b1, w2, b2, *, max_tile=None):
    """Row-major convenience wrapper: x (N, 4) f32 -> logits (N, 3) f32."""
    # TODO(synk): this transpose/cast relayout is a standalone XLA HBM pass that can
    # cost more bytes than the kernel itself; in a real pipeline keep activations in
    # the feature-major (4, N) bf16 layout end-to-end and call irisnet_forward_cn.
    out_cn = irisnet_forward_cn(x.astype(jnp.bfloat16).T, w1, b1, w2, b2,
                                out_dtype=jnp.float32, max_tile=max_tile)
    return out_cn.T


def init_params(key):
    """PyTorch nn.Linear-style init, stored in torch layout (out_features, in_features)."""
    k1, k2, k3, k4 = jax.random.split(key, 4)
    bound1 = 1.0 / jnp.sqrt(4.0)
    bound2 = 1.0 / jnp.sqrt(10.0)
    w1 = jax.random.uniform(k1, (10, 4), jnp.float32, -bound1, bound1)
    b1 = jax.random.uniform(k2, (10,), jnp.float32, -bound1, bound1)
    w2 = jax.random.uniform(k3, (3, 10), jnp.float32, -bound2, bound2)
    b2 = jax.random.uniform(k4, (3,), jnp.float32, -bound2, bound2)
    return w1, b1, w2, b2


if __name__ == "__main__":
    key = jax.random.PRNGKey(0)
    kx, kp = jax.random.split(key)
    w1, b1, w2, b2 = init_params(kp)

    def ref_f32(xx):  # exact PyTorch-semantics reference
        return jnp.maximum(xx @ w1.T + b1, 0.0) @ w2.T + b2

    def ref_bf16_policy(xx):  # reference matching the kernel's bf16-stream dtype policy
        f32 = jnp.float32
        xb = xx.astype(jnp.bfloat16).astype(f32)
        w1b = w1.astype(jnp.bfloat16).astype(f32)
        w2b = w2.astype(jnp.bfloat16).astype(f32)
        h = jnp.maximum(xb @ w1b.T + b1, 0.0).astype(jnp.bfloat16).astype(f32)
        return h @ w2b.T + b2

    # Small batch: one grid step (two on v7x, so both TensorCores stay warm-path tested).
    batch = 8
    x = jax.random.normal(kx, (batch, 4), jnp.float32)
    out = jax.block_until_ready(irisnet_forward(x, w1, b1, w2, b2))
    assert out.shape == (batch, 3)
    assert jnp.allclose(out, ref_bf16_policy(x), atol=1e-2, rtol=1e-2)
    assert jnp.allclose(out, ref_f32(x), atol=5e-2, rtol=5e-2)

    # Larger, non-tile-divisible batch with a forced small tile to exercise the
    # multi-step pipeline and the minimal-padding path.
    batch2 = 600
    x2 = jax.random.normal(jax.random.fold_in(kx, 1), (batch2, 4), jnp.float32)
    out2 = jax.block_until_ready(irisnet_forward(x2, w1, b1, w2, b2, max_tile=256))
    assert out2.shape == (batch2, 3)
    assert jnp.allclose(out2, ref_bf16_policy(x2), atol=1e-2, rtol=1e-2)

    # Layout-native CN path with bf16 logits (no wrapper relayout passes).
    out_cn = jax.block_until_ready(
        irisnet_forward_cn(x2.astype(jnp.bfloat16).T, w1, b1, w2, b2, max_tile=256))
    assert out_cn.shape == (3, batch2)
    assert jnp.allclose(out_cn.astype(jnp.float32).T, ref_bf16_policy(x2),
                        atol=2e-2, rtol=2e-2)

    print("KERNEL_OK")
</pallas_src>

<mosaic_0001>
module attributes {stable_mosaic.version = 11 : i64} {
  func.func @irisnet_kernel(%arg0: i32, %arg1: memref<4x256xbf16, #tpu.memory_space<vmem>>, %arg2: memref<10x4xbf16, #tpu.memory_space<vmem>>, %arg3: memref<10x1xf32, #tpu.memory_space<vmem>>, %arg4: memref<3x10xbf16, #tpu.memory_space<vmem>>, %arg5: memref<3x1xf32, #tpu.memory_space<vmem>>, %arg6: memref<3x256xf32, #tpu.memory_space<vmem>>) attributes {dimension_semantics = [#tpu.dimension_semantics<parallel>], iteration_bounds = array<i64: 1>, scalar_prefetch = 0 : i64, scratch_operands = 0 : i64, tpu.core_type = #tpu.core_type<tc>, window_params = [{transform_indices = @transform_0, window_bounds = array<i64: 4, 256>}, {pipeline_mode = #tpu.pipeline_mode<synchronous>, transform_indices = @transform_1, window_bounds = array<i64: 10, 4>}, {pipeline_mode = #tpu.pipeline_mode<synchronous>, transform_indices = @transform_2, window_bounds = array<i64: 10, 1>}, {pipeline_mode = #tpu.pipeline_mode<synchronous>, transform_indices = @transform_3, window_bounds = array<i64: 3, 10>}, {pipeline_mode = #tpu.pipeline_mode<synchronous>, transform_indices = @transform_4, window_bounds = array<i64: 3, 1>}, {transform_indices = @transform_5, window_bounds = array<i64: 3, 256>}]} {
    %c0 = arith.constant 0 : index
    %c0_0 = arith.constant 0 : index
    %0 = vector.load %arg2[%c0, %c0_0] : memref<10x4xbf16, #tpu.memory_space<vmem>>, vector<10x4xbf16>
    %c0_1 = arith.constant 0 : index
    %c0_2 = arith.constant 0 : index
    %1 = vector.load %arg1[%c0_1, %c0_2] : memref<4x256xbf16, #tpu.memory_space<vmem>>, vector<4x256xbf16>
    %cst = arith.constant dense<0.000000e+00> : vector<10x256xf32>
    %2 = tpu.matmul %0, %1, %cst {dimension_numbers = #tpu.dot_dimension_numbers<[1], [0], [0], [1], [0, 0, 1, 1], [], []>} : vector<10x4xbf16>, vector<4x256xbf16>, vector<10x256xf32> -> vector<10x256xf32>
    %c0_3 = arith.constant 0 : index
    %c0_4 = arith.constant 0 : index
    %3 = vector.load %arg3[%c0_3, %c0_4] : memref<10x1xf32, #tpu.memory_space<vmem>>, vector<10x1xf32>
    %4 = vector.broadcast %3 : vector<10x1xf32> to vector<10x256xf32>
    %5 = arith.addf %2, %4 : vector<10x256xf32>
    %cst_5 = arith.constant 0.000000e+00 : f32
    %6 = vector.broadcast %cst_5 : f32 to vector<10x256xf32>
    %7 = arith.maximumf %5, %6 : vector<10x256xf32>
    %c0_6 = arith.constant 0 : index
    %c0_7 = arith.constant 0 : index
    %8 = vector.load %arg4[%c0_6, %c0_7] : memref<3x10xbf16, #tpu.memory_space<vmem>>, vector<3x10xbf16>
    %9 = arith.truncf %7 : vector<10x256xf32> to vector<10x256xbf16>
    %cst_8 = arith.constant dense<0.000000e+00> : vector<3x256xf32>
    %10 = tpu.matmul %8, %9, %cst_8 {dimension_numbers = #tpu.dot_dimension_numbers<[1], [0], [0], [1], [0, 0, 1, 1], [], []>} : vector<3x10xbf16>, vector<10x256xbf16>, vector<3x256xf32> -> vector<3x256xf32>
    %c0_9 = arith.constant 0 : index
    %c0_10 = arith.constant 0 : index
    %11 = vector.load %arg5[%c0_9, %c0_10] : memref<3x1xf32, #tpu.memory_space<vmem>>, vector<3x1xf32>
    %12 = vector.broadcast %11 : vector<3x1xf32> to vector<3x256xf32>
    %13 = arith.addf %10, %12 : vector<3x256xf32>
    %c0_11 = arith.constant 0 : index
    %c0_12 = arith.constant 0 : index
    %14 = vector.load %arg6[%c0_11, %c0_12] : memref<3x256xf32, #tpu.memory_space<vmem>>, vector<3x256xf32>
    tpu.vector_store %arg6[%c0_11, %c0_12], %13 {strides = array<i32>} : memref<3x256xf32, #tpu.memory_space<vmem>>, vector<3x256xf32>,
    return
  }
  func.func @transform_0(%arg0: i32) -> (i32, i32) {
    %c0_i32 = arith.constant 0 : i32
    %c0_i32_0 = arith.constant 0 : i32
    return %c0_i32, %arg0 : i32, i32
  }
  func.func @transform_1(%arg0: i32) -> (i32, i32) {
    %c0_i32 = arith.constant 0 : i32
    %c0_i32_0 = arith.constant 0 : i32
    %c0_i32_1 = arith.constant 0 : i32
    return %c0_i32, %c0_i32_0 : i32, i32
  }
  func.func @transform_2(%arg0: i32) -> (i32, i32) {
    %c0_i32 = arith.constant 0 : i32
    %c0_i32_0 = arith.constant 0 : i32
    %c0_i32_1 = arith.constant 0 : i32
    return %c0_i32, %c0_i32_0 : i32, i32
  }
  func.func @transform_3(%arg0: i32) -> (i32, i32) {
    %c0_i32 = arith.constant 0 : i32
    %c0_i32_0 = arith.constant 0 : i32
    %c0_i32_1 = arith.constant 0 : i32
    return %c0_i32, %c0_i32_0 : i32, i32
  }
  func.func @transform_4(%arg0: i32) -> (i32, i32) {
    %c0_i32 = arith.constant 0 : i32
    %c0_i32_0 = arith.constant 0 : i32
    %c0_i32_1 = arith.constant 0 : i32
    return %c0_i32, %c0_i32_0 : i32, i32
  }
  func.func @transform_5(%arg0: i32) -> (i32, i32) {
    %c0_i32 = arith.constant 0 : i32
    %c0_i32_0 = arith.constant 0 : i32
    return %c0_i32, %arg0 : i32, i32
  }
}

</mosaic_0001>

<llo_original>
// kernel: tpu_custom_call.1
$region0: #{tpu_custom_call.1}
  #allocation0 [shape = 'u32[]', space=smem, size = 0x4, offset = 0x4, fixed_abs, tag = 'smem constant byte address 0x4 - core index']
  #allocation1 [shape = 'u32[144,128]{1,0:T(1,128)}', space=vmem, size = 0x12000, scoped, tag = 'internal scratch']
  %s0 = inlined_call_operand.vmem [shape: bf16[4,256], index: 0, kind: input, shape index: {}]
  %s1 = inlined_call_operand.vmem [shape: bf16[10,4], index: 1, kind: input, shape index: {}]
  %s2 = inlined_call_operand.vmem [shape: f32[10,1], index: 2, kind: input, shape index: {}]
  %s3 = inlined_call_operand.vmem [shape: bf16[3,10], index: 3, kind: input, shape index: {}]
  %s4 = inlined_call_operand.vmem [shape: f32[3,1], index: 4, kind: input, shape index: {}]
  %s5 = inlined_call_operand.hbm [shape: f32[3,256], index: 5, kind: output, shape index: {}]
  %s6 = sld [smem:[#allocation0]]
  $region30: #{tpu_custom_call.1} parent=0
    _
  %s8 = ssub.s32 1, %s6
  %s9 = scalar_select 0, %s8, %s6
  $region1: #{tpu_custom_call.1} parent=0
    #allocation2 [shape = 'u8[4096]{0}', space=vmem, size = 0x1000, scoped, tag = 'output window, operand 0, single buffered']
    #allocation3 [shape = 's32[1]{0}', space=sflag, size = 0x4, scoped, tag = 'scoped memory for tpu_custom_call.1']
    %10 = vsyncpa [#allocation3], 0
    // Predicated region
    $region2: #{tpu_custom_call.1} parent=1 // pred_check
      _
    $region3: #{tpu_custom_call.1} parent=1 // pred_check_branch
      %12 = sbr.rel (0) target = $region5
    $region4: #{tpu_custom_call.1} parent=1 // pred_region
      _
    $region5: #{tpu_custom_call.1} parent=1 // pred_fallthru
      _
    // Predicated region
    $region6: #{tpu_custom_call.1} parent=1 // pred_check
      _
    $region7: #{tpu_custom_call.1} parent=1 // pred_check_branch
      %14 = sbr.rel (0) target = $region9
    $region8: #{tpu_custom_call.1} parent=1 // pred_region
      _
    $region9: #{tpu_custom_call.1} parent=1 // pred_fallthru
      _
    // Predicated region
    $region10: #{tpu_custom_call.1} parent=1 // pred_check
      _
    $region11: #{tpu_custom_call.1} parent=1 // pred_check_branch
      %16 = sbr.rel (0) target = $region13
    $region12: #{tpu_custom_call.1} parent=1 // pred_region
      _
    $region13: #{tpu_custom_call.1} parent=1 // pred_fallthru
      _
    // Predicated region
    $region14: #{tpu_custom_call.1} parent=1 // pred_check
      _
    $region15: #{tpu_custom_call.1} parent=1 // pred_check_branch
      %18 = sbr.rel (0) target = $region17
    $region16: #{tpu_custom_call.1} parent=1 // pred_region
      _
    $region17: #{tpu_custom_call.1} parent=1 // pred_fallthru
      _
    // Predicated region
    $region18: #{tpu_custom_call.1} parent=1 // pred_check
      _
    $region19: #{tpu_custom_call.1} parent=1 // pred_check_branch
      %20 = sbr.rel (0) target = $region21
    $region20: #{tpu_custom_call.1} parent=1 // pred_region
      _
    $region21: #{tpu_custom_call.1} parent=1 // pred_fallthru
      _
    %v22 = vld [vmem:[%s1] sm:$0xf]
    %v23 = vld [vmem:[%s1 + $0x4] sm:$0x1]
    %v24 = vld [vmem:[%s0] sm:$0xf]
    %v25 = vld [vmem:[%s2] sm:$0xff]
    %v26 = vld [vmem:[%s2 + $0x8] sm:$0x3]
    %28 = vset.pattern.permute.xlu0 0
    %29 = vperm.xlu0 %28, %v25
    %v30 = vpop.permute.xlu0 %29
    %33 = vset.pattern.permute.xlu0 0
    %34 = vperm.xlu0 %33, %v26
    %v35 = vpop.permute.xlu0 %34
    %v39 = vunpack.c.l.b16 %v22
    %v40 = vunpack.c.l.b16 %v23
    %v41 = vpack.c.b16 %v40, %v39
    %v44 = vunpack.c.l.s4 1983009808
    %v45 = vunpack.c.0.s8 %v44
    %v46 = vlaneseq
    %v47 = vshrl.u32 %v46, 7
    %v48 = vsub.s32 %v45, %v47
    %v49 = vrot.slane %v24, %v48
    %v50 = vcombine.high %v49, %v49
    %vm51 = vcmask 31744
    %v53 = vsel %vm51, %v41, 0
    %vm55 = vcmask 1041408
    %v57 = vsel %vm55, %v49, 0
    %v60 = vsel %vm55, %v50, 0
    %62 = vmatprep.subr.bf16.mxu0 0
    %63 = vmatpush1.bf16.msra.mxu0 0
    %64 = vmatprep.subr.bf16.mxu0 0
    %65 = vmatpush1.bf16.msra.mxu0 0
    %66 = vmatprep.subr.bf16.mxu0 0
    %67 = vmatpush1.bf16.msra.mxu0 0
    %68 = vmatprep.subr.bf16.mxu0 0
    %69 = vmatpush1.bf16.msra.mxu0 0
    %70 = vmatprep.subr.bf16.mxu0 0
    %71 = vmatpush1.bf16.msra.mxu0 0
    %72 = vmatprep.subr.bf16.mxu0 0
    %73 = vmatpush1.bf16.msra.mxu0 0
    %74 = vmatprep.subr.bf16.mxu0 0
    %75 = vmatpush1.bf16.msra.mxu0 0
    %76 = vmatprep.subr.bf16.mxu0 %v60
    %77 = vmatpush1.bf16.msra.mxu0 %v57
    %78 = vmatprep.subr.bf16.mxu0 0
    %79 = vmatpush2.bf16.msra.mxu0 0
    %80 = vmatprep.subr.bf16.mxu0 0
    %81 = vmatpush2.bf16.msra.mxu0 0
    %82 = vmatprep.subr.bf16.mxu0 0
    %83 = vmatpush2.bf16.msra.mxu0 0
    %84 = vmatprep.subr.bf16.mxu0 0
    %85 = vmatpush2.bf16.msra.mxu0 0
    %86 = vmatprep.subr.bf16.mxu0 0
    %87 = vmatpush2.bf16.msra.mxu0 0
    %88 = vmatprep.subr.bf16.mxu0 0
    %89 = vmatpush2.bf16.msra.mxu0 0
    %90 = vmatprep.subr.bf16.mxu0 0
    %91 = vmatpush2.bf16.msra.mxu0 0
    %92 = vmatprep.subr.bf16.mxu0 0
    %93 = vmatpush2.bf16.msra.mxu0 0
    %94 = vmatprep.mubr.bf16.mxu0 0
    %95 = vmatmul.mubr.bf16.gmra.mxu0 %v53
    %v96 = vpop.f32.mrf.mxu0
    %v97 = vadd.f32 %v30, %v96
    %v98 = vpop.f32.mrf.mxu0
    %v99 = vadd.f32 %v30, %v98
    %v100 = vpop.f32.mrf.mxu0
    %v101 = vadd.f32 %v35, %v100
    %v102 = vpop.f32.mrf.mxu0
    %v103 = vadd.f32 %v35, %v102
    %104 = vdwg.mxu0
    %v105 = vmax.f32 %v97, 0.0
    %v106 = vmax.f32 %v99, 0.0
    %v107 = vmax.f32 %v101, 0.0
    %v108 = vmax.f32 %v103, 0.0
    %v109 = vld [vmem:[%s3] sm:$0x3]
    %v110 = vpack.c.bf16 %v107, %v105
    %v111 = vpack.c.bf16 %v108, %v106
    %v112 = vld [vmem:[%s4] sm:$0x7]
    %114 = vset.pattern.permute.xlu0 0
    %115 = vperm.xlu0 %114, %v112
    %v116 = vpop.permute.xlu0 %115
    %vm118 = vcmask 80896
    %v120 = vsel %vm118, %v109, 0
    %vm122 = vcmask 1044480
    %v124 = vsel %vm122, %v110, 0
    %v127 = vsel %vm122, %v111, 0
    %129 = vmatprep.subr.bf16.mxu0 0
    %130 = vmatpush1.bf16.msra.mxu0 0
    %131 = vmatprep.subr.bf16.mxu0 0
    %132 = vmatpush1.bf16.msra.mxu0 0
    %133 = vmatprep.subr.bf16.mxu0 0
    %134 = vmatpush1.bf16.msra.mxu0 0
    %135 = vmatprep.subr.bf16.mxu0 0
    %136 = vmatpush1.bf16.msra.mxu0 0
    %137 = vmatprep.subr.bf16.mxu0 0
    %138 = vmatpush1.bf16.msra.mxu0 0
    %139 = vmatprep.subr.bf16.mxu0 0
    %140 = vmatpush1.bf16.msra.mxu0 0
    %141 = vmatprep.subr.bf16.mxu0 0
    %142 = vmatpush1.bf16.msra.mxu0 0
    %143 = vmatprep.subr.bf16.mxu0 %v127
    %144 = vmatpush1.bf16.msra.mxu0 %v124
    %145 = vmatprep.subr.bf16.mxu0 0
    %146 = vmatpush2.bf16.msra.mxu0 0
    %147 = vmatprep.subr.bf16.mxu0 0
    %148 = vmatpush2.bf16.msra.mxu0 0
    %149 = vmatprep.subr.bf16.mxu0 0
    %150 = vmatpush2.bf16.msra.mxu0 0
    %151 = vmatprep.subr.bf16.mxu0 0
    %152 = vmatpush2.bf16.msra.mxu0 0
    %153 = vmatprep.subr.bf16.mxu0 0
    %154 = vmatpush2.bf16.msra.mxu0 0
    %155 = vmatprep.subr.bf16.mxu0 0
    %156 = vmatpush2.bf16.msra.mxu0 0
    %157 = vmatprep.subr.bf16.mxu0 0
    %158 = vmatpush2.bf16.msra.mxu0 0
    %159 = vmatprep.subr.bf16.mxu0 0
    %160 = vmatpush2.bf16.msra.mxu0 0
    %161 = vmatprep.mubr.bf16.mxu0 0
    %162 = vmatmul.mubr.bf16.gmra.mxu0 %v120
    %v163 = vpop.f32.mrf.mxu0
    %v164 = vadd.f32 %v116, %v163
    %v165 = vpop.f32.mrf.mxu0
    %v166 = vadd.f32 %v116, %v165
    %v167 = vpop.f32.mrf.mxu0
    %v168 = vpop.f32.mrf.mxu0
    %169 = vdwg.mxu0
    %v172 = vcombine.low %v164, %v166
    %174 = vst [vmem:[#allocation2] sm:$0x77] %v172
    // Predicated region
    $region22: #{tpu_custom_call.1} parent=1 // pred_check
      _
    $region23: #{tpu_custom_call.1} parent=1 // pred_check_branch
      %176 = sbr.rel (0) target = $region25
    $region24: #{tpu_custom_call.1} parent=1 // pred_region
      %s178 = ssub.s32 128, 128
      %179 = vsyncadd [#allocation3], %s178
      %s181 = sshll.u32 [#allocation2], 4
      %s182 = int_to_ptr.vmem [resolvable:$true] %s181
      %184 = dma.vmem_to_hbm [thread:$0]  %s182, 128, %s5, [#allocation3]
    $region25: #{tpu_custom_call.1} parent=1 // pred_fallthru
      _
    // Predicated region
    $region26: #{tpu_custom_call.1} parent=1 // pred_check
      _
    $region27: #{tpu_custom_call.1} parent=1 // pred_check_branch
      %186 = sbr.rel (0) target = $region29
    $region28: #{tpu_custom_call.1} parent=1 // pred_region
      %187 = dma.done [#allocation3], 128
    $region29: #{tpu_custom_call.1} parent=1 // pred_fallthru
      _
    %188 = vsyncpa [#allocation3], 1

</llo_original>
